<compile_context>
chip_gen: v7x
topology: tpu7x:2x2x1
jax: 0.10.0
libtpu: 0.0.40
codegen_flags: <defaults>
</compile_context>

<pallas_src>
import math

import jax
import jax.numpy as jnp
from jax.experimental import pallas as pl
from jax.experimental.pallas import tpu as pltpu

_INV_SQRT2 = 0.7071067811865476


def _gelu_exact(x):
    # PyTorch F.gelu default: 0.5 * x * (1 + erf(x / sqrt(2)))
    return 0.5 * x * (1.0 + jax.lax.erf(x * jnp.asarray(_INV_SQRT2, x.dtype)))


def _make_kernel(matmul_dtype):
    def kernel(eeg_ref, wenc_ref, benc_ref, w1_ref, b1_ref, w2_ref, b2_ref,
               out_ref):
        # eeg_ref:  (TILE_B, S, D)
        # wenc_ref: (D, K),      benc_ref: (1, K)
        # w1_ref:   (K, K//2),   b1_ref:   (1, K//2)
        # w2_ref:   (K//2, Cp),  b2_ref:   (1, Cp)   (Cp = ncls padded to 128)
        # out_ref:  (TILE_B, Cp)

        # --- time-mean folded through the linear encoder ---------------------
        # mean_s(x_s @ W + b) == mean_s(x_s) @ W + b  (exact: encoder is linear)
        pooled_in = jnp.mean(eeg_ref[...].astype(jnp.float32), axis=1)  # (TB, D)

        # --- encoder projection D -> K (MXU), f32 accumulation ---------------
        enc = jnp.dot(pooled_in.astype(matmul_dtype),
                      wenc_ref[...].astype(matmul_dtype),
                      preferred_element_type=jnp.float32) + benc_ref[...]

        # --- fc: K -> K//2, exact gelu (f32 elementwise, erf on the EUP) -----
        h = jnp.dot(enc.astype(matmul_dtype),
                    w1_ref[...].astype(matmul_dtype),
                    preferred_element_type=jnp.float32) + b1_ref[...]
        h = _gelu_exact(h)

        # --- classifier: K//2 -> Cp (lane-dense, unmasked store) -------------
        logits = jnp.dot(h.astype(matmul_dtype),
                         w2_ref[...].astype(matmul_dtype),
                         preferred_element_type=jnp.float32) + b2_ref[...]
        out_ref[...] = logits.astype(out_ref.dtype)

    return kernel


def eeg_emotion_forward(eeg, params, *, tile_b=8, matmul_dtype=jnp.float32):
    """eeg: (B, S, D) float32. Returns logits (B, ncls) float32.

    tile_b: batch rows per grid step (multiple of 8).  For real shapes pick the
            largest multiple of 8 such that 2 * tile_b*S*D*bytes (double-buffered
            input) + resident weights stays well under the scoped VMEM limit
            (v7x has only 64 MiB physical VMEM).
    matmul_dtype: jnp.bfloat16 for real encoder dims; accumulation stays f32.
    """
    wenc, benc, w1, b1, w2, b2 = (params["wenc"], params["benc"],
                                  params["w1"], params["b1"],
                                  params["w2"], params["b2"])
    B, S, D = eeg.shape
    K = wenc.shape[1]
    KH = w1.shape[1]
    ncls = w2.shape[1]

    # Lane-dense output: pad classifier output channels up to a multiple of 128
    # so the result store is an unmasked vst; slice back after the kernel.
    LANES = 128
    c_pad = pl.cdiv(ncls, LANES) * LANES
    w2p = jnp.pad(w2, ((0, 0), (0, c_pad - ncls))) if c_pad != ncls else w2
    b2p = jnp.pad(b2, ((0, 0), (0, c_pad - ncls))) if c_pad != ncls else b2

    # Pad batch to a multiple of the batch tile (pad rows are sliced off).
    tile_b = max(8, (tile_b // 8) * 8)
    b_pad = pl.cdiv(B, tile_b) * tile_b
    eeg_p = jnp.pad(eeg, ((0, b_pad - B), (0, 0), (0, 0))) if b_pad != B else eeg

    grid = (b_pad // tile_b,)

    out_p = pl.pallas_call(
        _make_kernel(matmul_dtype),
        out_shape=jax.ShapeDtypeStruct((b_pad, c_pad), jnp.float32),
        grid_spec=pltpu.PrefetchScalarGridSpec(
            num_scalar_prefetch=0,
            grid=grid,
            in_specs=[
                # eeg: tiled over batch, software-pipelined across grid steps.
                pl.BlockSpec((tile_b, S, D), lambda i: (i, 0, 0)),
                # Weights/biases: constant index_map -> stay VMEM-resident.
                pl.BlockSpec((D, K), lambda i: (0, 0)),       # wenc
                pl.BlockSpec((1, K), lambda i: (0, 0)),       # benc
                pl.BlockSpec((K, KH), lambda i: (0, 0)),      # w1
                pl.BlockSpec((1, KH), lambda i: (0, 0)),      # b1
                pl.BlockSpec((KH, c_pad), lambda i: (0, 0)),  # w2 (lane-padded)
                pl.BlockSpec((1, c_pad), lambda i: (0, 0)),   # b2 (lane-padded)
            ],
            out_specs=pl.BlockSpec((tile_b, c_pad), lambda i: (i, 0)),
        ),
        compiler_params=pltpu.CompilerParams(
            # Batch axis is embarrassingly parallel -> shard across the two
            # TensorCores on v7x; harmless (single TC) on v5e/v6e.
            dimension_semantics=("parallel",),
        ),
    )(eeg_p, wenc, benc, w1, b1, w2p, b2p)

    return out_p[:B, :ncls]


def init_params(key, d_in, k, ncls):
    """Deterministic parameter init (PyTorch Linear-style uniform bounds)."""
    ks = jax.random.split(key, 6)

    def linear(kw, kb, fan_in, fan_out):
        bound = 1.0 / math.sqrt(fan_in)
        w = jax.random.uniform(kw, (fan_in, fan_out), jnp.float32, -bound, bound)
        b = jax.random.uniform(kb, (1, fan_out), jnp.float32, -bound, bound)
        return w, b

    wenc, benc = linear(ks[0], ks[1], d_in, k)          # encoder stand-in
    w1, b1 = linear(ks[2], ks[3], k, k // 2)            # self.fc
    w2, b2 = linear(ks[4], ks[5], k // 2, ncls)         # self.classifier
    return {"wenc": wenc, "benc": benc, "w1": w1, "b1": b1, "w2": w2, "b2": b2}


def reference_forward(eeg, params):
    """Pure-JAX reference (matches the original per-timestep formulation)."""
    enc = jnp.einsum("bsd,dk->bsk", eeg, params["wenc"]) + params["benc"][0]
    pooled = enc.mean(axis=1)
    h = pooled @ params["w1"] + params["b1"][0]
    h = 0.5 * h * (1.0 + jax.lax.erf(h / jnp.sqrt(2.0)))
    return h @ params["w2"] + params["b2"][0]


if __name__ == "__main__":
    # Small shapes consistent with the module:
    #   B=2 trials, S=8 time steps, D=16 input features,
    #   eeg_conformer_k K=32, ncalss=4.
    B, S, D = 2, 8, 16
    K, NCLS = 32, 4

    key = jax.random.PRNGKey(0)
    k_eeg, k_params = jax.random.split(key)
    eeg = jax.random.normal(k_eeg, (B, S, D), dtype=jnp.float32)
    params = init_params(k_params, D, K, NCLS)

    out = eeg_emotion_forward(eeg, params)
    out = jax.block_until_ready(out)

    ref = reference_forward(eeg, params)
    assert out.shape == (B, NCLS)
    assert jnp.allclose(out, ref, atol=1e-4, rtol=1e-4)

    # TODO(synk): the real eeg_encoder (e.g. an EEG-Conformer) is an external,
    # non-linear module; the time-mean fold applied here is exact only for the
    # linear stand-in and must revert to per-timestep encoding for the real one.
    print("KERNEL_OK")
</pallas_src>

<mosaic_0001>
module attributes {stable_mosaic.version = 11 : i64} {
  func.func @kernel(%arg0: i32, %arg1: memref<8x8x16xf32, #tpu.memory_space<vmem>>, %arg2: memref<16x32xf32, #tpu.memory_space<vmem>>, %arg3: memref<1x32xf32, #tpu.memory_space<vmem>>, %arg4: memref<32x16xf32, #tpu.memory_space<vmem>>, %arg5: memref<1x16xf32, #tpu.memory_space<vmem>>, %arg6: memref<16x128xf32, #tpu.memory_space<vmem>>, %arg7: memref<1x128xf32, #tpu.memory_space<vmem>>, %arg8: memref<8x128xf32, #tpu.memory_space<vmem>>) attributes {dimension_semantics = [#tpu.dimension_semantics<parallel>], iteration_bounds = array<i64: 1>, scalar_prefetch = 0 : i64, scratch_operands = 0 : i64, tpu.core_type = #tpu.core_type<tc>, window_params = [{transform_indices = @transform_0, window_bounds = array<i64: 8, 8, 16>}, {pipeline_mode = #tpu.pipeline_mode<synchronous>, transform_indices = @transform_1, window_bounds = array<i64: 16, 32>}, {pipeline_mode = #tpu.pipeline_mode<synchronous>, transform_indices = @transform_2, window_bounds = array<i64: 1, 32>}, {pipeline_mode = #tpu.pipeline_mode<synchronous>, transform_indices = @transform_3, window_bounds = array<i64: 32, 16>}, {pipeline_mode = #tpu.pipeline_mode<synchronous>, transform_indices = @transform_4, window_bounds = array<i64: 1, 16>}, {pipeline_mode = #tpu.pipeline_mode<synchronous>, transform_indices = @transform_5, window_bounds = array<i64: 16, 128>}, {pipeline_mode = #tpu.pipeline_mode<synchronous>, transform_indices = @transform_6, window_bounds = array<i64: 1, 128>}, {transform_indices = @transform_7, window_bounds = array<i64: 8, 128>}]} {
    %c0 = arith.constant 0 : index
    %c0_0 = arith.constant 0 : index
    %c0_1 = arith.constant 0 : index
    %0 = vector.load %arg1[%c0, %c0_0, %c0_1] : memref<8x8x16xf32, #tpu.memory_space<vmem>>, vector<8x8x16xf32>
    %cst = arith.constant dense<0.000000e+00> : vector<8x16xf32>
    %1 = vector.multi_reduction <add>, %0, %cst [1] : vector<8x8x16xf32> to vector<8x16xf32>
    %cst_2 = arith.constant 8.000000e+00 : f32
    %2 = vector.broadcast %cst_2 : f32 to vector<8x16xf32>
    %3 = arith.divf %1, %2 : vector<8x16xf32>
    %c0_3 = arith.constant 0 : index
    %c0_4 = arith.constant 0 : index
    %4 = vector.load %arg2[%c0_3, %c0_4] : memref<16x32xf32, #tpu.memory_space<vmem>>, vector<16x32xf32>
    %cst_5 = arith.constant dense<0.000000e+00> : vector<8x32xf32>
    %5 = tpu.matmul %3, %4, %cst_5 {dimension_numbers = #tpu.dot_dimension_numbers<[1], [0], [0], [1], [0, 0, 1, 1], [], []>} : vector<8x16xf32>, vector<16x32xf32>, vector<8x32xf32> -> vector<8x32xf32>
    %c0_6 = arith.constant 0 : index
    %c0_7 = arith.constant 0 : index
    %6 = vector.load %arg3[%c0_6, %c0_7] : memref<1x32xf32, #tpu.memory_space<vmem>>, vector<1x32xf32>
    %7 = vector.broadcast %6 : vector<1x32xf32> to vector<8x32xf32>
    %8 = arith.addf %5, %7 : vector<8x32xf32>
    %c0_8 = arith.constant 0 : index
    %c0_9 = arith.constant 0 : index
    %9 = vector.load %arg4[%c0_8, %c0_9] : memref<32x16xf32, #tpu.memory_space<vmem>>, vector<32x16xf32>
    %cst_10 = arith.constant dense<0.000000e+00> : vector<8x16xf32>
    %10 = tpu.matmul %8, %9, %cst_10 {dimension_numbers = #tpu.dot_dimension_numbers<[1], [0], [0], [1], [0, 0, 1, 1], [], []>} : vector<8x32xf32>, vector<32x16xf32>, vector<8x16xf32> -> vector<8x16xf32>
    %c0_11 = arith.constant 0 : index
    %c0_12 = arith.constant 0 : index
    %11 = vector.load %arg5[%c0_11, %c0_12] : memref<1x16xf32, #tpu.memory_space<vmem>>, vector<1x16xf32>
    %12 = vector.broadcast %11 : vector<1x16xf32> to vector<8x16xf32>
    %13 = arith.addf %10, %12 : vector<8x16xf32>
    %cst_13 = arith.constant 5.000000e-01 : f32
    %14 = vector.broadcast %cst_13 : f32 to vector<8x16xf32>
    %15 = arith.mulf %14, %13 : vector<8x16xf32>
    %cst_14 = arith.constant 0.707106769 : f32
    %16 = vector.broadcast %cst_14 : f32 to vector<8x16xf32>
    %17 = arith.mulf %13, %16 : vector<8x16xf32>
    %18 = math.erf %17 : vector<8x16xf32>
    %cst_15 = arith.constant 1.000000e+00 : f32
    %19 = vector.broadcast %cst_15 : f32 to vector<8x16xf32>
    %20 = arith.addf %19, %18 : vector<8x16xf32>
    %21 = arith.mulf %15, %20 : vector<8x16xf32>
    %c0_16 = arith.constant 0 : index
    %c0_17 = arith.constant 0 : index
    %22 = vector.load %arg6[%c0_16, %c0_17] : memref<16x128xf32, #tpu.memory_space<vmem>>, vector<16x128xf32>
    %cst_18 = arith.constant dense<0.000000e+00> : vector<8x128xf32>
    %23 = tpu.matmul %21, %22, %cst_18 {dimension_numbers = #tpu.dot_dimension_numbers<[1], [0], [0], [1], [0, 0, 1, 1], [], []>} : vector<8x16xf32>, vector<16x128xf32>, vector<8x128xf32> -> vector<8x128xf32>
    %c0_19 = arith.constant 0 : index
    %c0_20 = arith.constant 0 : index
    %24 = vector.load %arg7[%c0_19, %c0_20] : memref<1x128xf32, #tpu.memory_space<vmem>>, vector<1x128xf32>
    %25 = vector.broadcast %24 : vector<1x128xf32> to vector<8x128xf32>
    %26 = arith.addf %23, %25 : vector<8x128xf32>
    %c0_21 = arith.constant 0 : index
    %c0_22 = arith.constant 0 : index
    %27 = vector.load %arg8[%c0_21, %c0_22] : memref<8x128xf32, #tpu.memory_space<vmem>>, vector<8x128xf32>
    tpu.vector_store %arg8[%c0_21, %c0_22], %26 {strides = array<i32>} : memref<8x128xf32, #tpu.memory_space<vmem>>, vector<8x128xf32>,
    return
  }
  func.func @transform_0(%arg0: i32) -> (i32, i32, i32) {
    %c0_i32 = arith.constant 0 : i32
    %c0_i32_0 = arith.constant 0 : i32
    %c0_i32_1 = arith.constant 0 : i32
    return %arg0, %c0_i32, %c0_i32_0 : i32, i32, i32
  }
  func.func @transform_1(%arg0: i32) -> (i32, i32) {
    %c0_i32 = arith.constant 0 : i32
    %c0_i32_0 = arith.constant 0 : i32
    %c0_i32_1 = arith.constant 0 : i32
    return %c0_i32, %c0_i32_0 : i32, i32
  }
  func.func @transform_2(%arg0: i32) -> (i32, i32) {
    %c0_i32 = arith.constant 0 : i32
    %c0_i32_0 = arith.constant 0 : i32
    %c0_i32_1 = arith.constant 0 : i32
    return %c0_i32, %c0_i32_0 : i32, i32
  }
  func.func @transform_3(%arg0: i32) -> (i32, i32) {
    %c0_i32 = arith.constant 0 : i32
    %c0_i32_0 = arith.constant 0 : i32
    %c0_i32_1 = arith.constant 0 : i32
    return %c0_i32, %c0_i32_0 : i32, i32
  }
  func.func @transform_4(%arg0: i32) -> (i32, i32) {
    %c0_i32 = arith.constant 0 : i32
    %c0_i32_0 = arith.constant 0 : i32
    %c0_i32_1 = arith.constant 0 : i32
    return %c0_i32, %c0_i32_0 : i32, i32
  }
  func.func @transform_5(%arg0: i32) -> (i32, i32) {
    %c0_i32 = arith.constant 0 : i32
    %c0_i32_0 = arith.constant 0 : i32
    %c0_i32_1 = arith.constant 0 : i32
    return %c0_i32, %c0_i32_0 : i32, i32
  }
  func.func @transform_6(%arg0: i32) -> (i32, i32) {
    %c0_i32 = arith.constant 0 : i32
    %c0_i32_0 = arith.constant 0 : i32
    %c0_i32_1 = arith.constant 0 : i32
    return %c0_i32, %c0_i32_0 : i32, i32
  }
  func.func @transform_7(%arg0: i32) -> (i32, i32) {
    %c0_i32 = arith.constant 0 : i32
    %c0_i32_0 = arith.constant 0 : i32
    return %arg0, %c0_i32 : i32, i32
  }
}

</mosaic_0001>

<llo_original>
// kernel: tpu_custom_call.1
$region0: #{tpu_custom_call.1}
  #allocation0 [shape = 'u32[]', space=smem, size = 0x4, offset = 0x4, fixed_abs, tag = 'smem constant byte address 0x4 - core index']
  #allocation1 [shape = 'u32[144,128]{1,0:T(1,128)}', space=vmem, size = 0x12000, scoped, tag = 'internal scratch']
  %s0 = inlined_call_operand.hbm [shape: f32[8,8,16], index: 0, kind: input, shape index: {}]
  %s1 = inlined_call_operand.vmem [shape: f32[16,32], index: 1, kind: input, shape index: {}]
  %s2 = inlined_call_operand.vmem [shape: f32[1,32], index: 2, kind: input, shape index: {}]
  %s3 = inlined_call_operand.vmem [shape: f32[32,16], index: 3, kind: input, shape index: {}]
  %s4 = inlined_call_operand.vmem [shape: f32[1,16], index: 4, kind: input, shape index: {}]
  %s5 = inlined_call_operand.vmem [shape: f32[16,128], index: 5, kind: input, shape index: {}]
  %s6 = inlined_call_operand.vmem [shape: f32[1,128], index: 6, kind: input, shape index: {}]
  %s7 = inlined_call_operand.hbm [shape: f32[8,128], index: 7, kind: output, shape index: {}]
  %s8 = sld [smem:[#allocation0]]
  $region42: #{tpu_custom_call.1} parent=0
    _
  %s10 = ssub.s32 1, %s8
  %s11 = scalar_select 0, %s10, %s8
  $region1: #{tpu_custom_call.1} parent=0
    #allocation2 [shape = 'u8[32768]{0}', space=vmem, size = 0x8000, scoped, tag = 'input window, operand 0, single buffered']
    #allocation3 [shape = 's32[1]{0}', space=sflag, size = 0x4, scoped, tag = 'scoped memory for tpu_custom_call.1']
    #allocation4 [shape = 's32[1]{0}', space=sflag, size = 0x4, scoped, tag = 'scoped memory for tpu_custom_call.1']
    #allocation5 [shape = 'u8[4096]{0}', space=vmem, size = 0x1000, scoped, tag = 'output window, operand 0, single buffered']
    %12 = vsyncpa [#allocation3], 0
    %13 = vsyncpa [#allocation4], 0
    // Predicated region
    $region2: #{tpu_custom_call.1} parent=1 // pred_check
      _
    $region3: #{tpu_custom_call.1} parent=1 // pred_check_branch
      %15 = sbr.rel (0) target = $region5
    $region4: #{tpu_custom_call.1} parent=1 // pred_region
      %s17 = ssub.s32 1024, 1024
      %18 = vsyncadd [#allocation3], %s17
      %s19 = sshll.u32 [#allocation2], 4
      %s20 = int_to_ptr.vmem [resolvable:$true] %s19
      %25 = dma.hbm_to_vmem [thread:$0]  %s0, 1024, %s20, [#allocation3], 128, 128, 8
    $region5: #{tpu_custom_call.1} parent=1 // pred_fallthru
      _
    // Predicated region
    $region6: #{tpu_custom_call.1} parent=1 // pred_check
      _
    $region7: #{tpu_custom_call.1} parent=1 // pred_check_branch
      %27 = sbr.rel (0) target = $region9
    $region8: #{tpu_custom_call.1} parent=1 // pred_region
      _
    $region9: #{tpu_custom_call.1} parent=1 // pred_fallthru
      _
    // Predicated region
    $region10: #{tpu_custom_call.1} parent=1 // pred_check
      _
    $region11: #{tpu_custom_call.1} parent=1 // pred_check_branch
      %29 = sbr.rel (0) target = $region13
    $region12: #{tpu_custom_call.1} parent=1 // pred_region
      _
    $region13: #{tpu_custom_call.1} parent=1 // pred_fallthru
      _
    // Predicated region
    $region14: #{tpu_custom_call.1} parent=1 // pred_check
      _
    $region15: #{tpu_custom_call.1} parent=1 // pred_check_branch
      %31 = sbr.rel (0) target = $region17
    $region16: #{tpu_custom_call.1} parent=1 // pred_region
      _
    $region17: #{tpu_custom_call.1} parent=1 // pred_fallthru
      _
    // Predicated region
    $region18: #{tpu_custom_call.1} parent=1 // pred_check
      _
    $region19: #{tpu_custom_call.1} parent=1 // pred_check_branch
      %33 = sbr.rel (0) target = $region21
    $region20: #{tpu_custom_call.1} parent=1 // pred_region
      _
    $region21: #{tpu_custom_call.1} parent=1 // pred_fallthru
      _
    // Predicated region
    $region22: #{tpu_custom_call.1} parent=1 // pred_check
      _
    $region23: #{tpu_custom_call.1} parent=1 // pred_check_branch
      %35 = sbr.rel (0) target = $region25
    $region24: #{tpu_custom_call.1} parent=1 // pred_region
      _
    $region25: #{tpu_custom_call.1} parent=1 // pred_fallthru
      _
    // Predicated region
    $region26: #{tpu_custom_call.1} parent=1 // pred_check
      _
    $region27: #{tpu_custom_call.1} parent=1 // pred_check_branch
      %37 = sbr.rel (0) target = $region29
    $region28: #{tpu_custom_call.1} parent=1 // pred_region
      _
    $region29: #{tpu_custom_call.1} parent=1 // pred_fallthru
      _
    // Predicated region
    $region30: #{tpu_custom_call.1} parent=1 // pred_check
      _
    $region31: #{tpu_custom_call.1} parent=1 // pred_check_branch
      %39 = sbr.rel (0) target = $region33
    $region32: #{tpu_custom_call.1} parent=1 // pred_region
      %40 = dma.done [#allocation3], 1024
    $region33: #{tpu_custom_call.1} parent=1 // pred_fallthru
      _
    %v41 = vld [vmem:[#allocation2] sm:$0xff]
    %v42 = vld [vmem:[#allocation2 + $0x8] sm:$0xff]
    %v43 = vld [vmem:[#allocation2 + $0x10] sm:$0xff]
    %v44 = vld [vmem:[#allocation2 + $0x18] sm:$0xff]
    %v45 = vld [vmem:[#allocation2 + $0x20] sm:$0xff]
    %v46 = vld [vmem:[#allocation2 + $0x28] sm:$0xff]
    %v47 = vld [vmem:[#allocation2 + $0x30] sm:$0xff]
    %v48 = vld [vmem:[#allocation2 + $0x38] sm:$0xff]
    %vm49 = vcmask 130048
    %v50 = vsel %vm49, %v41, 0.0
    %v51 = vrot.slane %v50, 4
    %v52 = vadd.f32 %v50, %v51
    %v53 = vrot.slane %v52, 2
    %v54 = vadd.f32 %v52, %v53
    %v55 = vrot.slane %v54, 1
    %v56 = vadd.f32 %v54, %v55
    %v57 = vsel %vm49, %v42, 0.0
    %v58 = vrot.slane %v57, 4
    %v59 = vadd.f32 %v57, %v58
    %v60 = vrot.slane %v59, 2
    %v61 = vadd.f32 %v59, %v60
    %v62 = vrot.slane %v61, 1
    %v63 = vadd.f32 %v61, %v62
    %v64 = vsel %vm49, %v43, 0.0
    %v65 = vrot.slane %v64, 4
    %v66 = vadd.f32 %v64, %v65
    %v67 = vrot.slane %v66, 2
    %v68 = vadd.f32 %v66, %v67
    %v69 = vrot.slane %v68, 1
    %v70 = vadd.f32 %v68, %v69
    %v71 = vsel %vm49, %v44, 0.0
    %v72 = vrot.slane %v71, 4
    %v73 = vadd.f32 %v71, %v72
    %v74 = vrot.slane %v73, 2
    %v75 = vadd.f32 %v73, %v74
    %v76 = vrot.slane %v75, 1
    %v77 = vadd.f32 %v75, %v76
    %v78 = vsel %vm49, %v45, 0.0
    %v79 = vrot.slane %v78, 4
    %v80 = vadd.f32 %v78, %v79
    %v81 = vrot.slane %v80, 2
    %v82 = vadd.f32 %v80, %v81
    %v83 = vrot.slane %v82, 1
    %v84 = vadd.f32 %v82, %v83
    %v85 = vsel %vm49, %v46, 0.0
    %v86 = vrot.slane %v85, 4
    %v87 = vadd.f32 %v85, %v86
    %v88 = vrot.slane %v87, 2
    %v89 = vadd.f32 %v87, %v88
    %v90 = vrot.slane %v89, 1
    %v91 = vadd.f32 %v89, %v90
    %v92 = vsel %vm49, %v47, 0.0
    %v93 = vrot.slane %v92, 4
    %v94 = vadd.f32 %v92, %v93
    %v95 = vrot.slane %v94, 2
    %v96 = vadd.f32 %v94, %v95
    %v97 = vrot.slane %v96, 1
    %v98 = vadd.f32 %v96, %v97
    %v99 = vsel %vm49, %v48, 0.0
    %v100 = vrot.slane %v99, 4
    %v101 = vadd.f32 %v99, %v100
    %v102 = vrot.slane %v101, 2
    %v103 = vadd.f32 %v101, %v102
    %v104 = vrot.slane %v103, 1
    %v105 = vadd.f32 %v103, %v104
    %v106 = vrcp.pop 8.0
    %v107 = vmul.f32 %v56, %v106
    %v108 = vmul.f32 %v63, %v106
    %v109 = vmul.f32 %v70, %v106
    %v110 = vmul.f32 %v77, %v106
    %v111 = vmul.f32 %v84, %v106
    %v112 = vmul.f32 %v91, %v106
    %v113 = vmul.f32 %v98, %v106
    %v114 = vmul.f32 %v105, %v106
    %v115 = vld [vmem:[%s1] sm:$0xff]
    %v116 = vld [vmem:[%s1 + $0x8] sm:$0xff]
    %v117 = vld [vmem:[%s2] sm:$0x1]
    %v119 = vlaneseq
    %v120 = vshrl.u32 %v119, 7
    %v121 = vsub.s32 0, %v120
    %v122 = vrot.slane %v117, %v121
    %vm132 = vcmask 1041409
    %v133 = vsel %vm132, %v108, %v107
    %vm134 = vcmask 1042434
    %v135 = vsel %vm134, %v109, %v133
    %vm136 = vcmask 1043459
    %v137 = vsel %vm136, %v110, %v135
    %vm138 = vcmask 1044484
    %v139 = vsel %vm138, %v111, %v137
    %vm140 = vcmask 1045509
    %v141 = vsel %vm140, %v112, %v139
    %vm142 = vcmask 1046534
    %v143 = vsel %vm142, %v113, %v141
    %vm144 = vcmask 1047559
    %v145 = vsel %vm144, %v114, %v143
    %v146 = vsel %vm49, %v145, 0
    %148 = vmatprep.subr.mxu0 0.0
    %149 = vmatpush1.msra.mxu0 %v115
    %150 = vmatprep.subr.mxu0 0.0
    %151 = vmatpush1.msra.mxu0 %v116
    %152 = vmatprep.subr.mxu0 0.0
    %153 = vmatpush1.msra.mxu0 0.0
    %154 = vmatprep.subr.mxu0 0.0
    %155 = vmatpush1.msra.mxu0 0.0
    %156 = vmatprep.subr.mxu0 0.0
    %157 = vmatpush1.msra.mxu0 0.0
    %158 = vmatprep.subr.mxu0 0.0
    %159 = vmatpush1.msra.mxu0 0.0
    %160 = vmatprep.subr.mxu0 0.0
    %161 = vmatpush1.msra.mxu0 0.0
    %162 = vmatprep.subr.mxu0 0.0
    %163 = vmatpush1.msra.mxu0 0.0
    %164 = vmatprep.subr.mxu0 0.0
    %165 = vmatpush1.msra.mxu0 0.0
    %166 = vmatprep.subr.mxu0 0.0
    %167 = vmatpush1.msra.mxu0 0.0
    %168 = vmatprep.subr.mxu0 0.0
    %169 = vmatpush1.msra.mxu0 0.0
    %170 = vmatprep.subr.mxu0 0.0
    %171 = vmatpush1.msra.mxu0 0.0
    %172 = vmatprep.subr.mxu0 0.0
    %173 = vmatpush1.msra.mxu0 0.0
    %174 = vmatprep.subr.mxu0 0.0
    %175 = vmatpush1.msra.mxu0 0.0
    %176 = vmatprep.subr.mxu0 0.0
    %177 = vmatpush1.msra.mxu0 0.0
    %178 = vmatprep.subr.mxu0 0.0
    %179 = vmatpush1.msra.mxu0 0.0
    %180 = vmatprep.subr.mxu0 0.0
    %181 = vmatpush1.msra.mxu0 0.0
    %182 = vmatprep.subr.mxu0 0.0
    %183 = vmatpush1.msra.mxu0 0.0
    %184 = vmatprep.subr.mxu0 0.0
    %185 = vmatpush1.msra.mxu0 0.0
    %186 = vmatprep.subr.mxu0 0.0
    %187 = vmatpush1.msra.mxu0 0.0
    %188 = vmatprep.subr.mxu0 0.0
    %189 = vmatpush1.msra.mxu0 0.0
    %190 = vmatprep.subr.mxu0 0.0
    %191 = vmatpush1.msra.mxu0 0.0
    %192 = vmatprep.subr.mxu0 0.0
    %193 = vmatpush1.msra.mxu0 0.0
    %194 = vmatprep.subr.mxu0 0.0
    %195 = vmatpush1.msra.mxu0 0.0
    %196 = vmatprep.subr.mxu0 0.0
    %197 = vmatpush1.msra.mxu0 0.0
    %198 = vmatprep.subr.mxu0 0.0
    %199 = vmatpush1.msra.mxu0 0.0
    %200 = vmatprep.subr.mxu0 0.0
    %201 = vmatpush1.msra.mxu0 0.0
    %202 = vmatprep.subr.mxu0 0.0
    %203 = vmatpush1.msra.mxu0 0.0
    %204 = vmatprep.subr.mxu0 0.0
    %205 = vmatpush1.msra.mxu0 0.0
    %206 = vmatprep.subr.mxu0 0.0
    %207 = vmatpush1.msra.mxu0 0.0
    %208 = vmatprep.subr.mxu0 0.0
    %209 = vmatpush1.msra.mxu0 0.0
    %210 = vmatprep.subr.mxu0 0.0
    %211 = vmatpush1.msra.mxu0 0.0
    %212 = vmatprep.mubr.f32.mxu0 0.0
    %213 = vmatmul.mubr.f32.gmra.mrb[0].mxu0 %v146
    %v214 = vpop.f32.mrb[0].mxu0
    %v215 = vadd.f32 %v122, %v214
    %v216 = vpop.f32.mrb[0].mxu0
    %217 = vdwg.mxu0
    %v218 = vld [vmem:[%s3] sm:$0xff]
    %v219 = vld [vmem:[%s3 + $0x8] sm:$0xff]
    %v220 = vld [vmem:[%s3 + $0x10] sm:$0xff]
    %v221 = vld [vmem:[%s3 + $0x18] sm:$0xff]
    %v222 = vld [vmem:[%s4] sm:$0x1]
    %v224 = vlaneseq
    %v225 = vshrl.u32 %v224, 7
    %v226 = vsub.s32 0, %v225
    %v227 = vrot.slane %v222, %v226
    %vm229 = vcmask 261120
    %v231 = vsel %vm229, %v215, 0
    %233 = vmatprep.subr.mxu0 0.0
    %234 = vmatpush1.msra.mxu0 %v218
    %235 = vmatprep.subr.mxu0 0.0
    %236 = vmatpush1.msra.mxu0 %v219
    %237 = vmatprep.subr.mxu0 0.0
    %238 = vmatpush1.msra.mxu0 %v220
    %239 = vmatprep.subr.mxu0 0.0
    %240 = vmatpush1.msra.mxu0 %v221
    %241 = vmatprep.subr.mxu0 0.0
    %242 = vmatpush1.msra.mxu0 0.0
    %243 = vmatprep.subr.mxu0 0.0
    %244 = vmatpush1.msra.mxu0 0.0
    %245 = vmatprep.subr.mxu0 0.0
    %246 = vmatpush1.msra.mxu0 0.0
    %247 = vmatprep.subr.mxu0 0.0
    %248 = vmatpush1.msra.mxu0 0.0
    %249 = vmatprep.subr.mxu0 0.0
    %250 = vmatpush1.msra.mxu0 0.0
    %251 = vmatprep.subr.mxu0 0.0
    %252 = vmatpush1.msra.mxu0 0.0
    %253 = vmatprep.subr.mxu0 0.0
    %254 = vmatpush1.msra.mxu0 0.0
    %255 = vmatprep.subr.mxu0 0.0
    %256 = vmatpush1.msra.mxu0 0.0
    %257 = vmatprep.subr.mxu0 0.0
    %258 = vmatpush1.msra.mxu0 0.0
    %259 = vmatprep.subr.mxu0 0.0
    %260 = vmatpush1.msra.mxu0 0.0
    %261 = vmatprep.subr.mxu0 0.0
    %262 = vmatpush1.msra.mxu0 0.0
    %263 = vmatprep.subr.mxu0 0.0
    %264 = vmatpush1.msra.mxu0 0.0
    %265 = vmatprep.subr.mxu0 0.0
    %266 = vmatpush1.msra.mxu0 0.0
    %267 = vmatprep.subr.mxu0 0.0
    %268 = vmatpush1.msra.mxu0 0.0
    %269 = vmatprep.subr.mxu0 0.0
    %270 = vmatpush1.msra.mxu0 0.0
    %271 = vmatprep.subr.mxu0 0.0
    %272 = vmatpush1.msra.mxu0 0.0
    %273 = vmatprep.subr.mxu0 0.0
    %274 = vmatpush1.msra.mxu0 0.0
    %275 = vmatprep.subr.mxu0 0.0
    %276 = vmatpush1.msra.mxu0 0.0
    %277 = vmatprep.subr.mxu0 0.0
    %278 = vmatpush1.msra.mxu0 0.0
    %279 = vmatprep.subr.mxu0 0.0
    %280 = vmatpush1.msra.mxu0 0.0
    %281 = vmatprep.subr.mxu0 0.0
    %282 = vmatpush1.msra.mxu0 0.0
    %283 = vmatprep.subr.mxu0 0.0
    %284 = vmatpush1.msra.mxu0 0.0
    %285 = vmatprep.subr.mxu0 0.0
    %286 = vmatpush1.msra.mxu0 0.0
    %287 = vmatprep.subr.mxu0 0.0
    %288 = vmatpush1.msra.mxu0 0.0
    %289 = vmatprep.subr.mxu0 0.0
    %290 = vmatpush1.msra.mxu0 0.0
    %291 = vmatprep.subr.mxu0 0.0
    %292 = vmatpush1.msra.mxu0 0.0
    %293 = vmatprep.subr.mxu0 0.0
    %294 = vmatpush1.msra.mxu0 0.0
    %295 = vmatprep.subr.mxu0 0.0
    %296 = vmatpush1.msra.mxu0 0.0
    %297 = vmatprep.mubr.f32.mxu0 0.0
    %298 = vmatmul.mubr.f32.gmra.mrb[0].mxu0 %v231
    %v299 = vpop.f32.mrb[0].mxu0
    %v300 = vadd.f32 %v227, %v299
    %v301 = vpop.f32.mrb[0].mxu0
    %302 = vdwg.mxu0
    %v303 = vmul.f32 %v300, 0.5
    %v304 = vmul.f32 %v300, 0.70710677
    %v305 = verf.f32.pop %v304
    %v306 = vadd.f32 %v305, 1.0
    %v307 = vmul.f32 %v303, %v306
    %v308 = vld [vmem:[%s5] sm:$0xff]
    %v309 = vld [vmem:[%s5 + $0x8] sm:$0xff]
    %v310 = vld [vmem:[%s6] sm:$0x1]
    %v312 = vlaneseq
    %v313 = vshrl.u32 %v312, 7
    %v314 = vsub.s32 0, %v313
    %v315 = vrot.slane %v310, %v314
    %v318 = vsel %vm49, %v307, 0
    %320 = vmatprep.subr.mxu0 0.0
    %321 = vmatpush1.msra.mxu0 %v308
    %322 = vmatprep.subr.mxu0 0.0
    %323 = vmatpush1.msra.mxu0 %v309
    %324 = vmatprep.subr.mxu0 0.0
    %325 = vmatpush1.msra.mxu0 0.0
    %326 = vmatprep.subr.mxu0 0.0
    %327 = vmatpush1.msra.mxu0 0.0
    %328 = vmatprep.subr.mxu0 0.0
    %329 = vmatpush1.msra.mxu0 0.0
    %330 = vmatprep.subr.mxu0 0.0
    %331 = vmatpush1.msra.mxu0 0.0
    %332 = vmatprep.subr.mxu0 0.0
    %333 = vmatpush1.msra.mxu0 0.0
    %334 = vmatprep.subr.mxu0 0.0
    %335 = vmatpush1.msra.mxu0 0.0
    %336 = vmatprep.subr.mxu0 0.0
    %337 = vmatpush1.msra.mxu0 0.0
    %338 = vmatprep.subr.mxu0 0.0
    %339 = vmatpush1.msra.mxu0 0.0
    %340 = vmatprep.subr.mxu0 0.0
    %341 = vmatpush1.msra.mxu0 0.0
    %342 = vmatprep.subr.mxu0 0.0
    %343 = vmatpush1.msra.mxu0 0.0
    %344 = vmatprep.subr.mxu0 0.0
    %345 = vmatpush1.msra.mxu0 0.0
    %346 = vmatprep.subr.mxu0 0.0
    %347 = vmatpush1.msra.mxu0 0.0
    %348 = vmatprep.subr.mxu0 0.0
    %349 = vmatpush1.msra.mxu0 0.0
    %350 = vmatprep.subr.mxu0 0.0
    %351 = vmatpush1.msra.mxu0 0.0
    %352 = vmatprep.subr.mxu0 0.0
    %353 = vmatpush1.msra.mxu0 0.0
    %354 = vmatprep.subr.mxu0 0.0
    %355 = vmatpush1.msra.mxu0 0.0
    %356 = vmatprep.subr.mxu0 0.0
    %357 = vmatpush1.msra.mxu0 0.0
    %358 = vmatprep.subr.mxu0 0.0
    %359 = vmatpush1.msra.mxu0 0.0
    %360 = vmatprep.subr.mxu0 0.0
    %361 = vmatpush1.msra.mxu0 0.0
    %362 = vmatprep.subr.mxu0 0.0
    %363 = vmatpush1.msra.mxu0 0.0
    %364 = vmatprep.subr.mxu0 0.0
    %365 = vmatpush1.msra.mxu0 0.0
    %366 = vmatprep.subr.mxu0 0.0
    %367 = vmatpush1.msra.mxu0 0.0
    %368 = vmatprep.subr.mxu0 0.0
    %369 = vmatpush1.msra.mxu0 0.0
    %370 = vmatprep.subr.mxu0 0.0
    %371 = vmatpush1.msra.mxu0 0.0
    %372 = vmatprep.subr.mxu0 0.0
    %373 = vmatpush1.msra.mxu0 0.0
    %374 = vmatprep.subr.mxu0 0.0
    %375 = vmatpush1.msra.mxu0 0.0
    %376 = vmatprep.subr.mxu0 0.0
    %377 = vmatpush1.msra.mxu0 0.0
    %378 = vmatprep.subr.mxu0 0.0
    %379 = vmatpush1.msra.mxu0 0.0
    %380 = vmatprep.subr.mxu0 0.0
    %381 = vmatpush1.msra.mxu0 0.0
    %382 = vmatprep.subr.mxu0 0.0
    %383 = vmatpush1.msra.mxu0 0.0
    %384 = vmatprep.mubr.f32.mxu0 0.0
    %385 = vmatmul.mubr.f32.gmra.mrb[0].mxu0 %v318
    %v386 = vpop.f32.mrb[0].mxu0
    %v387 = vadd.f32 %v315, %v386
    %v388 = vpop.f32.mrb[0].mxu0
    %389 = vdwg.mxu0
    %390 = vst [vmem:[#allocation5] sm:$0xff] %v387
    // Predicated region
    $region34: #{tpu_custom_call.1} parent=1 // pred_check
      _
    $region35: #{tpu_custom_call.1} parent=1 // pred_check_branch
      %392 = sbr.rel (0) target = $region37
    $region36: #{tpu_custom_call.1} parent=1 // pred_region
      %s394 = ssub.s32 128, 128
      %395 = vsyncadd [#allocation4], %s394
      %s397 = sshll.u32 [#allocation5], 4
      %s398 = int_to_ptr.vmem [resolvable:$true] %s397
      %400 = dma.vmem_to_hbm [thread:$0]  %s398, 128, %s7, [#allocation4]
    $region37: #{tpu_custom_call.1} parent=1 // pred_fallthru
      _
    // Predicated region
    $region38: #{tpu_custom_call.1} parent=1 // pred_check
      _
    $region39: #{tpu_custom_call.1} parent=1 // pred_check_branch
      %402 = sbr.rel (0) target = $region41
    $region40: #{tpu_custom_call.1} parent=1 // pred_region
      %403 = dma.done [#allocation4], 128
    $region41: #{tpu_custom_call.1} parent=1 // pred_fallthru
      _
    %404 = vsyncpa [#allocation3], 1
    %405 = vsyncpa [#allocation4], 1

</llo_original>
